<compile_context>
chip_gen: v7x
topology: tpu7x:2x2x1
jax: 0.10.0
libtpu: 0.0.40
codegen_flags: <defaults>
</compile_context>

<pallas_src>
import jax
import jax.numpy as jnp
from jax.experimental import pallas as pl
from jax.experimental.pallas import tpu as pltpu

ACTION_SPACE = 5
STATE_SIZE = 10

K_PAD = 16          # layer-1 contraction dim, padded 10 -> 16
H1, H2, H3 = 128, 128, 64
OUT_PAD = 128       # lane-dense output width (>= ACTION_SPACE)
DEFAULT_TB = 512    # batch tile for large B


def _round_up(n, m):
    return ((n + m - 1) // m) * m


def _mlp_kernel(x_ref, w1_ref, b1_ref, w2_ref, b2_ref, w3_ref, b3_ref,
                w4_ref, b4_ref, out_ref):
    # Compute dtype of the MXU inputs (f32 or bf16); accumulation is always f32.
    cdtype = w1_ref.dtype

    x = x_ref[...]

    # Layer 1: Linear(16(pad of 10) -> 128) + ReLU
    h = jnp.dot(x, w1_ref[...], preferred_element_type=jnp.float32) + b1_ref[...]
    h = jnp.maximum(h, 0.0)

    # Layer 2: Linear(128 -> 128) + ReLU
    h = jnp.dot(h.astype(cdtype), w2_ref[...],
                preferred_element_type=jnp.float32) + b2_ref[...]
    h = jnp.maximum(h, 0.0)

    # Layer 3: Linear(128 -> 64) + ReLU
    h = jnp.dot(h.astype(cdtype), w3_ref[...],
                preferred_element_type=jnp.float32) + b3_ref[...]
    h = jnp.maximum(h, 0.0)

    # Head: Linear(64 -> 128(pad of 5)); padded columns of w4/b4 are zero.
    out = jnp.dot(h.astype(cdtype), w4_ref[...],
                  preferred_element_type=jnp.float32) + b4_ref[...]
    out_ref[...] = out.astype(out_ref.dtype)


def net_forward(x, params, *, block_b=DEFAULT_TB):
    """x: [B, STATE_SIZE] float32; params: padded weights/biases from init_params."""
    w1, b1 = params["w1"], params["b1"]
    w2, b2 = params["w2"], params["b2"]
    w3, b3 = params["w3"], params["b3"]
    w4, b4 = params["w4"], params["b4"]
    cdtype = w1.dtype

    B = x.shape[0]
    TB = block_b if B >= block_b else max(8, _round_up(B, 8))
    B_pad = _round_up(B, TB)
    n_blocks = B_pad // TB

    # Pad batch to a multiple of TB and the contraction dim 10 -> 16; cast to the
    # compute dtype (bf16 weights => bf16 MXU inputs; accumulation stays f32).
    x_p = jnp.zeros((B_pad, K_PAD), cdtype).at[:B, :STATE_SIZE].set(x.astype(cdtype))

    # Weights/biases: full-array block, same (0, 0) block every grid step
    # -> DMA'd once, VMEM-resident across the batch loop.
    resident = lambda a: pl.BlockSpec(a.shape, lambda i: (0, 0))

    out = pl.pallas_call(
        _mlp_kernel,
        out_shape=jax.ShapeDtypeStruct((B_pad, OUT_PAD), jnp.float32),
        grid=(n_blocks,),
        in_specs=[
            pl.BlockSpec((TB, K_PAD), lambda i: (i, 0)),   # activation tile
            resident(w1), resident(b1),
            resident(w2), resident(b2),
            resident(w3), resident(b3),
            resident(w4), resident(b4),
        ],
        out_specs=pl.BlockSpec((TB, OUT_PAD), lambda i: (i, 0)),
        compiler_params=pltpu.CompilerParams(
            dimension_semantics=("parallel",)),  # megacore sharding on v7x
    )(x_p, w1, b1, w2, b2, w3, b3, w4, b4)

    return out[:B, :ACTION_SPACE]


def init_params(key, dtype=jnp.float32):
    """Deterministic init matching nn.Linear's default (uniform +/- 1/sqrt(fan_in)).

    Weights are stored [in_features, out_features] and zero-padded:
      w1: [16, 128] (rows 10..15 zero), w4: [64, 128] / b4: [1, 128] (cols 5.. zero).
    Weights use `dtype` (f32 or bf16); biases stay f32 (added to the f32 accumulator).
    """
    dims = [(STATE_SIZE, H1), (H1, H2), (H2, H3), (H3, ACTION_SPACE)]
    pad_dims = [(K_PAD, H1), (H1, H2), (H2, H3), (H3, OUT_PAD)]
    params = {}
    for i, ((fan_in, fan_out), (pin, pout)) in enumerate(zip(dims, pad_dims), start=1):
        key, kw, kb = jax.random.split(key, 3)
        bound = 1.0 / (fan_in ** 0.5)
        w = jax.random.uniform(kw, (fan_in, fan_out), jnp.float32,
                               minval=-bound, maxval=bound)
        b = jax.random.uniform(kb, (1, fan_out), jnp.float32,
                               minval=-bound, maxval=bound)
        w_p = jnp.zeros((pin, pout), jnp.float32).at[:fan_in, :fan_out].set(w)
        b_p = jnp.zeros((1, pout), jnp.float32).at[:, :fan_out].set(b)
        params[f"w{i}"] = w_p.astype(dtype)
        params[f"b{i}"] = b_p
    return params


def reference_forward(x, params):
    """Pure-JAX reference using the same (padded) params and the same casts."""
    cdtype = params["w1"].dtype

    def dot(a, w):
        return jnp.dot(a.astype(cdtype), w, preferred_element_type=jnp.float32)

    x_p = jnp.zeros((x.shape[0], K_PAD), x.dtype).at[:, :STATE_SIZE].set(x)
    h = jnp.maximum(dot(x_p, params["w1"]) + params["b1"], 0.0)
    h = jnp.maximum(dot(h, params["w2"]) + params["b2"], 0.0)
    h = jnp.maximum(dot(h, params["w3"]) + params["b3"], 0.0)
    out = dot(h, params["w4"]) + params["b4"]
    return out[:, :ACTION_SPACE]


if __name__ == "__main__":
    key = jax.random.PRNGKey(0)
    key, kx = jax.random.split(key)

    # --- f32 path, small batch: matches the PyTorch module's numerics ---
    B = 8
    x = jax.random.normal(kx, (B, STATE_SIZE), dtype=jnp.float32)
    params_f32 = init_params(key, dtype=jnp.float32)

    out = jax.jit(net_forward)(x, params_f32)
    jax.block_until_ready(out)
    ref = reference_forward(x, params_f32)
    assert out.shape == (B, ACTION_SPACE)
    assert jnp.allclose(out, ref, atol=1e-5, rtol=1e-5)

    # --- larger batch: exercises multi-step grid, batch padding, pipelining ---
    key, kx2 = jax.random.split(key)
    B2 = 600  # -> TB=512, B_pad=1024, 2 grid steps
    x2 = jax.random.normal(kx2, (B2, STATE_SIZE), dtype=jnp.float32)
    out2 = net_forward(x2, params_f32)
    jax.block_until_ready(out2)
    ref2 = reference_forward(x2, params_f32)
    assert out2.shape == (B2, ACTION_SPACE)
    assert jnp.allclose(out2, ref2, atol=1e-5, rtol=1e-5)

    # --- bf16 weights/activations with f32 accumulation (v6e/v7x fast path) ---
    params_bf16 = init_params(key, dtype=jnp.bfloat16)
    out_bf = net_forward(x, params_bf16)
    jax.block_until_ready(out_bf)
    ref_bf = reference_forward(x, params_bf16)
    assert out_bf.shape == (B, ACTION_SPACE)
    assert jnp.allclose(out_bf, ref_bf, atol=1e-2, rtol=1e-2)

    print("KERNEL_OK")
</pallas_src>

<mosaic_0001>
module attributes {stable_mosaic.version = 11 : i64} {
  func.func @_mlp_kernel(%arg0: i32, %arg1: memref<8x16xf32, #tpu.memory_space<vmem>>, %arg2: memref<16x128xf32, #tpu.memory_space<vmem>>, %arg3: memref<1x128xf32, #tpu.memory_space<vmem>>, %arg4: memref<128x128xf32, #tpu.memory_space<vmem>>, %arg5: memref<1x128xf32, #tpu.memory_space<vmem>>, %arg6: memref<128x64xf32, #tpu.memory_space<vmem>>, %arg7: memref<1x64xf32, #tpu.memory_space<vmem>>, %arg8: memref<64x128xf32, #tpu.memory_space<vmem>>, %arg9: memref<1x128xf32, #tpu.memory_space<vmem>>, %arg10: memref<8x128xf32, #tpu.memory_space<vmem>>) attributes {dimension_semantics = [#tpu.dimension_semantics<parallel>], iteration_bounds = array<i64: 1>, scalar_prefetch = 0 : i64, scratch_operands = 0 : i64, tpu.core_type = #tpu.core_type<tc>, window_params = [{transform_indices = @transform_0, window_bounds = array<i64: 8, 16>}, {pipeline_mode = #tpu.pipeline_mode<synchronous>, transform_indices = @transform_1, window_bounds = array<i64: 16, 128>}, {pipeline_mode = #tpu.pipeline_mode<synchronous>, transform_indices = @transform_2, window_bounds = array<i64: 1, 128>}, {pipeline_mode = #tpu.pipeline_mode<synchronous>, transform_indices = @transform_3, window_bounds = array<i64: 128, 128>}, {pipeline_mode = #tpu.pipeline_mode<synchronous>, transform_indices = @transform_4, window_bounds = array<i64: 1, 128>}, {pipeline_mode = #tpu.pipeline_mode<synchronous>, transform_indices = @transform_5, window_bounds = array<i64: 128, 64>}, {pipeline_mode = #tpu.pipeline_mode<synchronous>, transform_indices = @transform_6, window_bounds = array<i64: 1, 64>}, {pipeline_mode = #tpu.pipeline_mode<synchronous>, transform_indices = @transform_7, window_bounds = array<i64: 64, 128>}, {pipeline_mode = #tpu.pipeline_mode<synchronous>, transform_indices = @transform_8, window_bounds = array<i64: 1, 128>}, {transform_indices = @transform_9, window_bounds = array<i64: 8, 128>}]} {
    %c0 = arith.constant 0 : index
    %c0_0 = arith.constant 0 : index
    %0 = vector.load %arg1[%c0, %c0_0] : memref<8x16xf32, #tpu.memory_space<vmem>>, vector<8x16xf32>
    %c0_1 = arith.constant 0 : index
    %c0_2 = arith.constant 0 : index
    %1 = vector.load %arg2[%c0_1, %c0_2] : memref<16x128xf32, #tpu.memory_space<vmem>>, vector<16x128xf32>
    %cst = arith.constant dense<0.000000e+00> : vector<8x128xf32>
    %2 = tpu.matmul %0, %1, %cst {dimension_numbers = #tpu.dot_dimension_numbers<[1], [0], [0], [1], [0, 0, 1, 1], [], []>} : vector<8x16xf32>, vector<16x128xf32>, vector<8x128xf32> -> vector<8x128xf32>
    %c0_3 = arith.constant 0 : index
    %c0_4 = arith.constant 0 : index
    %3 = vector.load %arg3[%c0_3, %c0_4] : memref<1x128xf32, #tpu.memory_space<vmem>>, vector<1x128xf32>
    %4 = vector.broadcast %3 : vector<1x128xf32> to vector<8x128xf32>
    %5 = arith.addf %2, %4 : vector<8x128xf32>
    %cst_5 = arith.constant 0.000000e+00 : f32
    %6 = vector.broadcast %cst_5 : f32 to vector<8x128xf32>
    %7 = arith.maximumf %5, %6 : vector<8x128xf32>
    %c0_6 = arith.constant 0 : index
    %c0_7 = arith.constant 0 : index
    %8 = vector.load %arg4[%c0_6, %c0_7] : memref<128x128xf32, #tpu.memory_space<vmem>>, vector<128x128xf32>
    %cst_8 = arith.constant dense<0.000000e+00> : vector<8x128xf32>
    %9 = tpu.matmul %7, %8, %cst_8 {dimension_numbers = #tpu.dot_dimension_numbers<[1], [0], [0], [1], [0, 0, 1, 1], [], []>} : vector<8x128xf32>, vector<128x128xf32>, vector<8x128xf32> -> vector<8x128xf32>
    %c0_9 = arith.constant 0 : index
    %c0_10 = arith.constant 0 : index
    %10 = vector.load %arg5[%c0_9, %c0_10] : memref<1x128xf32, #tpu.memory_space<vmem>>, vector<1x128xf32>
    %11 = vector.broadcast %10 : vector<1x128xf32> to vector<8x128xf32>
    %12 = arith.addf %9, %11 : vector<8x128xf32>
    %cst_11 = arith.constant 0.000000e+00 : f32
    %13 = vector.broadcast %cst_11 : f32 to vector<8x128xf32>
    %14 = arith.maximumf %12, %13 : vector<8x128xf32>
    %c0_12 = arith.constant 0 : index
    %c0_13 = arith.constant 0 : index
    %15 = vector.load %arg6[%c0_12, %c0_13] : memref<128x64xf32, #tpu.memory_space<vmem>>, vector<128x64xf32>
    %cst_14 = arith.constant dense<0.000000e+00> : vector<8x64xf32>
    %16 = tpu.matmul %14, %15, %cst_14 {dimension_numbers = #tpu.dot_dimension_numbers<[1], [0], [0], [1], [0, 0, 1, 1], [], []>} : vector<8x128xf32>, vector<128x64xf32>, vector<8x64xf32> -> vector<8x64xf32>
    %c0_15 = arith.constant 0 : index
    %c0_16 = arith.constant 0 : index
    %17 = vector.load %arg7[%c0_15, %c0_16] : memref<1x64xf32, #tpu.memory_space<vmem>>, vector<1x64xf32>
    %18 = vector.broadcast %17 : vector<1x64xf32> to vector<8x64xf32>
    %19 = arith.addf %16, %18 : vector<8x64xf32>
    %cst_17 = arith.constant 0.000000e+00 : f32
    %20 = vector.broadcast %cst_17 : f32 to vector<8x64xf32>
    %21 = arith.maximumf %19, %20 : vector<8x64xf32>
    %c0_18 = arith.constant 0 : index
    %c0_19 = arith.constant 0 : index
    %22 = vector.load %arg8[%c0_18, %c0_19] : memref<64x128xf32, #tpu.memory_space<vmem>>, vector<64x128xf32>
    %cst_20 = arith.constant dense<0.000000e+00> : vector<8x128xf32>
    %23 = tpu.matmul %21, %22, %cst_20 {dimension_numbers = #tpu.dot_dimension_numbers<[1], [0], [0], [1], [0, 0, 1, 1], [], []>} : vector<8x64xf32>, vector<64x128xf32>, vector<8x128xf32> -> vector<8x128xf32>
    %c0_21 = arith.constant 0 : index
    %c0_22 = arith.constant 0 : index
    %24 = vector.load %arg9[%c0_21, %c0_22] : memref<1x128xf32, #tpu.memory_space<vmem>>, vector<1x128xf32>
    %25 = vector.broadcast %24 : vector<1x128xf32> to vector<8x128xf32>
    %26 = arith.addf %23, %25 : vector<8x128xf32>
    %c0_23 = arith.constant 0 : index
    %c0_24 = arith.constant 0 : index
    %27 = vector.load %arg10[%c0_23, %c0_24] : memref<8x128xf32, #tpu.memory_space<vmem>>, vector<8x128xf32>
    tpu.vector_store %arg10[%c0_23, %c0_24], %26 {strides = array<i32>} : memref<8x128xf32, #tpu.memory_space<vmem>>, vector<8x128xf32>,
    return
  }
  func.func @transform_0(%arg0: i32) -> (i32, i32) {
    %c0_i32 = arith.constant 0 : i32
    %c0_i32_0 = arith.constant 0 : i32
    return %arg0, %c0_i32 : i32, i32
  }
  func.func @transform_1(%arg0: i32) -> (i32, i32) {
    %c0_i32 = arith.constant 0 : i32
    %c0_i32_0 = arith.constant 0 : i32
    %c0_i32_1 = arith.constant 0 : i32
    return %c0_i32, %c0_i32_0 : i32, i32
  }
  func.func @transform_2(%arg0: i32) -> (i32, i32) {
    %c0_i32 = arith.constant 0 : i32
    %c0_i32_0 = arith.constant 0 : i32
    %c0_i32_1 = arith.constant 0 : i32
    return %c0_i32, %c0_i32_0 : i32, i32
  }
  func.func @transform_3(%arg0: i32) -> (i32, i32) {
    %c0_i32 = arith.constant 0 : i32
    %c0_i32_0 = arith.constant 0 : i32
    %c0_i32_1 = arith.constant 0 : i32
    return %c0_i32, %c0_i32_0 : i32, i32
  }
  func.func @transform_4(%arg0: i32) -> (i32, i32) {
    %c0_i32 = arith.constant 0 : i32
    %c0_i32_0 = arith.constant 0 : i32
    %c0_i32_1 = arith.constant 0 : i32
    return %c0_i32, %c0_i32_0 : i32, i32
  }
  func.func @transform_5(%arg0: i32) -> (i32, i32) {
    %c0_i32 = arith.constant 0 : i32
    %c0_i32_0 = arith.constant 0 : i32
    %c0_i32_1 = arith.constant 0 : i32
    return %c0_i32, %c0_i32_0 : i32, i32
  }
  func.func @transform_6(%arg0: i32) -> (i32, i32) {
    %c0_i32 = arith.constant 0 : i32
    %c0_i32_0 = arith.constant 0 : i32
    %c0_i32_1 = arith.constant 0 : i32
    return %c0_i32, %c0_i32_0 : i32, i32
  }
  func.func @transform_7(%arg0: i32) -> (i32, i32) {
    %c0_i32 = arith.constant 0 : i32
    %c0_i32_0 = arith.constant 0 : i32
    %c0_i32_1 = arith.constant 0 : i32
    return %c0_i32, %c0_i32_0 : i32, i32
  }
  func.func @transform_8(%arg0: i32) -> (i32, i32) {
    %c0_i32 = arith.constant 0 : i32
    %c0_i32_0 = arith.constant 0 : i32
    %c0_i32_1 = arith.constant 0 : i32
    return %c0_i32, %c0_i32_0 : i32, i32
  }
  func.func @transform_9(%arg0: i32) -> (i32, i32) {
    %c0_i32 = arith.constant 0 : i32
    %c0_i32_0 = arith.constant 0 : i32
    return %arg0, %c0_i32 : i32, i32
  }
}

</mosaic_0001>

<llo_original>
// kernel: net_forward.1
$region0: #{net_forward.1}
  #allocation0 [shape = 'u32[]', space=smem, size = 0x4, offset = 0x4, fixed_abs, tag = 'smem constant byte address 0x4 - core index']
  #allocation1 [shape = 'u32[144,128]{1,0:T(1,128)}', space=vmem, size = 0x12000, scoped, tag = 'internal scratch']
  %s0 = inlined_call_operand.vmem [shape: f32[8,16], index: 0, kind: input, shape index: {}]
  %s1 = inlined_call_operand.hbm [shape: f32[16,128], index: 1, kind: input, shape index: {}]
  %s2 = inlined_call_operand.hbm [shape: f32[1,128], index: 2, kind: input, shape index: {}]
  %s3 = inlined_call_operand.vmem [shape: f32[128,128], index: 3, kind: input, shape index: {}]
  %s4 = inlined_call_operand.hbm [shape: f32[1,128], index: 4, kind: input, shape index: {}]
  %s5 = inlined_call_operand.vmem [shape: f32[128,64], index: 5, kind: input, shape index: {}]
  %s6 = inlined_call_operand.hbm [shape: f32[1,64], index: 6, kind: input, shape index: {}]
  %s7 = inlined_call_operand.vmem [shape: f32[64,128], index: 7, kind: input, shape index: {}]
  %s8 = inlined_call_operand.hbm [shape: f32[1,128], index: 8, kind: input, shape index: {}]
  %s9 = inlined_call_operand.hbm [shape: f32[8,128], index: 9, kind: output, shape index: {}]
  %s10 = sld [smem:[#allocation0]]
  $region66: #{net_forward.1} parent=0
    _
  %s12 = ssub.s32 1, %s10
  %s13 = scalar_select 0, %s12, %s10
  $region1: #{net_forward.1} parent=0
    #allocation2 [shape = 'u8[8192]{0}', space=vmem, size = 0x2000, scoped, tag = 'input window, operand 1, single buffered']
    #allocation3 [shape = 's32[1]{0}', space=sflag, size = 0x4, scoped, tag = 'scoped memory for net_forward.1']
    #allocation4 [shape = 's32[1]{0}', space=sflag, size = 0x4, scoped, tag = 'scoped memory for net_forward.1']
    #allocation5 [shape = 'u8[512]{0}', space=vmem, size = 0x400, scoped, tag = 'input window, operand 2, single buffered']
    #allocation6 [shape = 's32[1]{0}', space=sflag, size = 0x4, scoped, tag = 'scoped memory for net_forward.1']
    #allocation7 [shape = 'u8[512]{0}', space=vmem, size = 0x400, scoped, tag = 'input window, operand 4, single buffered']
    #allocation8 [shape = 'u8[512]{0}', space=vmem, size = 0x400, scoped, tag = 'input window, operand 6, single buffered']
    #allocation9 [shape = 's32[1]{0}', space=sflag, size = 0x4, scoped, tag = 'scoped memory for net_forward.1']
    #allocation10 [shape = 'u8[512]{0}', space=vmem, size = 0x400, scoped, tag = 'input window, operand 8, single buffered']
    #allocation11 [shape = 'u8[4096]{0}', space=vmem, size = 0x1000, scoped, tag = 'output window, operand 0, single buffered']
    %14 = vsyncpa [#allocation3], 0
    %15 = vsyncpa [#allocation6], 0
    %16 = vsyncpa [#allocation9], 0
    %17 = vsyncpa [#allocation4], 0
    // Predicated region
    $region2: #{net_forward.1} parent=1 // pred_check
      _
    $region3: #{net_forward.1} parent=1 // pred_check_branch
      %19 = sbr.rel (0) target = $region5
    $region4: #{net_forward.1} parent=1 // pred_region
      _
    $region5: #{net_forward.1} parent=1 // pred_fallthru
      _
    // Predicated region
    $region6: #{net_forward.1} parent=1 // pred_check
      _
    $region7: #{net_forward.1} parent=1 // pred_check_branch
      %21 = sbr.rel (0) target = $region9
    $region8: #{net_forward.1} parent=1 // pred_region
      %s23 = ssub.s32 256, 256
      %24 = vsyncadd [#allocation3], %s23
      %s25 = sshll.u32 [#allocation2], 4
      %s26 = int_to_ptr.vmem [resolvable:$true] %s25
      %31 = dma.hbm_to_vmem [thread:$0]  %s1, 256, %s26, [#allocation3], 128, 128, 8
    $region9: #{net_forward.1} parent=1 // pred_fallthru
      _
    // Predicated region
    $region10: #{net_forward.1} parent=1 // pred_check
      _
    $region11: #{net_forward.1} parent=1 // pred_check_branch
      %33 = sbr.rel (0) target = $region13
    $region12: #{net_forward.1} parent=1 // pred_region
      %s35 = ssub.s32 16, 16
      %36 = vsyncadd [#allocation6], %s35
      %s38 = sshll.u32 [#allocation5], 4
      %s39 = int_to_ptr.vmem [resolvable:$true] %s38
      %41 = dma.hbm_to_vmem [thread:$0]  %s2, 16, %s39, [#allocation6]
    $region13: #{net_forward.1} parent=1 // pred_fallthru
      _
    // Predicated region
    $region14: #{net_forward.1} parent=1 // pred_check
      _
    $region15: #{net_forward.1} parent=1 // pred_check_branch
      %43 = sbr.rel (0) target = $region17
    $region16: #{net_forward.1} parent=1 // pred_region
      _
    $region17: #{net_forward.1} parent=1 // pred_fallthru
      _
    // Predicated region
    $region18: #{net_forward.1} parent=1 // pred_check
      _
    $region19: #{net_forward.1} parent=1 // pred_check_branch
      %45 = sbr.rel (0) target = $region21
    $region20: #{net_forward.1} parent=1 // pred_region
      %s47 = ssub.s32 16, 16
      %48 = vsyncadd [#allocation6], %s47
      %s50 = sshll.u32 [#allocation7], 4
      %s51 = int_to_ptr.vmem [resolvable:$true] %s50
      %53 = dma.hbm_to_vmem [thread:$0]  %s4, 16, %s51, [#allocation6]
    $region21: #{net_forward.1} parent=1 // pred_fallthru
      _
    // Predicated region
    $region22: #{net_forward.1} parent=1 // pred_check
      _
    $region23: #{net_forward.1} parent=1 // pred_check_branch
      %55 = sbr.rel (0) target = $region25
    $region24: #{net_forward.1} parent=1 // pred_region
      _
    $region25: #{net_forward.1} parent=1 // pred_fallthru
      _
    // Predicated region
    $region26: #{net_forward.1} parent=1 // pred_check
      _
    $region27: #{net_forward.1} parent=1 // pred_check_branch
      %57 = sbr.rel (0) target = $region29
    $region28: #{net_forward.1} parent=1 // pred_region
      %s59 = ssub.s32 16, 16
      %60 = vsyncadd [#allocation9], %s59
      %s62 = sshll.u32 [#allocation8], 4
      %s63 = int_to_ptr.vmem [resolvable:$true] %s62
      %65 = dma.hbm_to_vmem [thread:$0]  %s6, 16, %s63, [#allocation9]
    $region29: #{net_forward.1} parent=1 // pred_fallthru
      _
    // Predicated region
    $region30: #{net_forward.1} parent=1 // pred_check
      _
    $region31: #{net_forward.1} parent=1 // pred_check_branch
      %67 = sbr.rel (0) target = $region33
    $region32: #{net_forward.1} parent=1 // pred_region
      _
    $region33: #{net_forward.1} parent=1 // pred_fallthru
      _
    // Predicated region
    $region34: #{net_forward.1} parent=1 // pred_check
      _
    $region35: #{net_forward.1} parent=1 // pred_check_branch
      %69 = sbr.rel (0) target = $region37
    $region36: #{net_forward.1} parent=1 // pred_region
      %s71 = ssub.s32 16, 16
      %72 = vsyncadd [#allocation9], %s71
      %s74 = sshll.u32 [#allocation10], 4
      %s75 = int_to_ptr.vmem [resolvable:$true] %s74
      %77 = dma.hbm_to_vmem [thread:$0]  %s8, 16, %s75, [#allocation9]
    $region37: #{net_forward.1} parent=1 // pred_fallthru
      _
    // Predicated region
    $region38: #{net_forward.1} parent=1 // pred_check
      _
    $region39: #{net_forward.1} parent=1 // pred_check_branch
      %79 = sbr.rel (0) target = $region41
    $region40: #{net_forward.1} parent=1 // pred_region
      %80 = dma.done [#allocation3], 256
    $region41: #{net_forward.1} parent=1 // pred_fallthru
      _
    // Predicated region
    $region42: #{net_forward.1} parent=1 // pred_check
      _
    $region43: #{net_forward.1} parent=1 // pred_check_branch
      %82 = sbr.rel (0) target = $region45
    $region44: #{net_forward.1} parent=1 // pred_region
      %83 = dma.done [#allocation6], 16
    $region45: #{net_forward.1} parent=1 // pred_fallthru
      _
    // Predicated region
    $region46: #{net_forward.1} parent=1 // pred_check
      _
    $region47: #{net_forward.1} parent=1 // pred_check_branch
      %85 = sbr.rel (0) target = $region49
    $region48: #{net_forward.1} parent=1 // pred_region
      %86 = dma.done [#allocation6], 16
    $region49: #{net_forward.1} parent=1 // pred_fallthru
      _
    // Predicated region
    $region50: #{net_forward.1} parent=1 // pred_check
      _
    $region51: #{net_forward.1} parent=1 // pred_check_branch
      %88 = sbr.rel (0) target = $region53
    $region52: #{net_forward.1} parent=1 // pred_region
      %89 = dma.done [#allocation9], 16
    $region53: #{net_forward.1} parent=1 // pred_fallthru
      _
    // Predicated region
    $region54: #{net_forward.1} parent=1 // pred_check
      _
    $region55: #{net_forward.1} parent=1 // pred_check_branch
      %91 = sbr.rel (0) target = $region57
    $region56: #{net_forward.1} parent=1 // pred_region
      %92 = dma.done [#allocation9], 16
    $region57: #{net_forward.1} parent=1 // pred_fallthru
      _
    %v93 = vld [vmem:[%s0] sm:$0xff]
    %v94 = vld [vmem:[#allocation2] sm:$0xff]
    %v95 = vld [vmem:[#allocation2 + $0x8] sm:$0xff]
    %v96 = vld [vmem:[#allocation5] sm:$0x1]
    %v98 = vlaneseq
    %v99 = vshrl.u32 %v98, 7
    %v100 = vsub.s32 0, %v99
    %v101 = vrot.slane %v96, %v100
    %vm103 = vcmask 130048
    %v105 = vsel %vm103, %v93, 0
    %107 = vmatprep.subr.mxu0 0.0
    %108 = vmatpush1.msra.mxu0 %v94
    %109 = vmatprep.subr.mxu0 0.0
    %110 = vmatpush1.msra.mxu0 %v95
    %111 = vmatprep.subr.mxu0 0.0
    %112 = vmatpush1.msra.mxu0 0.0
    %113 = vmatprep.subr.mxu0 0.0
    %114 = vmatpush1.msra.mxu0 0.0
    %115 = vmatprep.subr.mxu0 0.0
    %116 = vmatpush1.msra.mxu0 0.0
    %117 = vmatprep.subr.mxu0 0.0
    %118 = vmatpush1.msra.mxu0 0.0
    %119 = vmatprep.subr.mxu0 0.0
    %120 = vmatpush1.msra.mxu0 0.0
    %121 = vmatprep.subr.mxu0 0.0
    %122 = vmatpush1.msra.mxu0 0.0
    %123 = vmatprep.subr.mxu0 0.0
    %124 = vmatpush1.msra.mxu0 0.0
    %125 = vmatprep.subr.mxu0 0.0
    %126 = vmatpush1.msra.mxu0 0.0
    %127 = vmatprep.subr.mxu0 0.0
    %128 = vmatpush1.msra.mxu0 0.0
    %129 = vmatprep.subr.mxu0 0.0
    %130 = vmatpush1.msra.mxu0 0.0
    %131 = vmatprep.subr.mxu0 0.0
    %132 = vmatpush1.msra.mxu0 0.0
    %133 = vmatprep.subr.mxu0 0.0
    %134 = vmatpush1.msra.mxu0 0.0
    %135 = vmatprep.subr.mxu0 0.0
    %136 = vmatpush1.msra.mxu0 0.0
    %137 = vmatprep.subr.mxu0 0.0
    %138 = vmatpush1.msra.mxu0 0.0
    %139 = vmatprep.subr.mxu0 0.0
    %140 = vmatpush1.msra.mxu0 0.0
    %141 = vmatprep.subr.mxu0 0.0
    %142 = vmatpush1.msra.mxu0 0.0
    %143 = vmatprep.subr.mxu0 0.0
    %144 = vmatpush1.msra.mxu0 0.0
    %145 = vmatprep.subr.mxu0 0.0
    %146 = vmatpush1.msra.mxu0 0.0
    %147 = vmatprep.subr.mxu0 0.0
    %148 = vmatpush1.msra.mxu0 0.0
    %149 = vmatprep.subr.mxu0 0.0
    %150 = vmatpush1.msra.mxu0 0.0
    %151 = vmatprep.subr.mxu0 0.0
    %152 = vmatpush1.msra.mxu0 0.0
    %153 = vmatprep.subr.mxu0 0.0
    %154 = vmatpush1.msra.mxu0 0.0
    %155 = vmatprep.subr.mxu0 0.0
    %156 = vmatpush1.msra.mxu0 0.0
    %157 = vmatprep.subr.mxu0 0.0
    %158 = vmatpush1.msra.mxu0 0.0
    %159 = vmatprep.subr.mxu0 0.0
    %160 = vmatpush1.msra.mxu0 0.0
    %161 = vmatprep.subr.mxu0 0.0
    %162 = vmatpush1.msra.mxu0 0.0
    %163 = vmatprep.subr.mxu0 0.0
    %164 = vmatpush1.msra.mxu0 0.0
    %165 = vmatprep.subr.mxu0 0.0
    %166 = vmatpush1.msra.mxu0 0.0
    %167 = vmatprep.subr.mxu0 0.0
    %168 = vmatpush1.msra.mxu0 0.0
    %169 = vmatprep.subr.mxu0 0.0
    %170 = vmatpush1.msra.mxu0 0.0
    %171 = vmatprep.mubr.f32.mxu0 0.0
    %172 = vmatmul.mubr.f32.gmra.mrb[0].mxu0 %v105
    %v173 = vpop.f32.mrb[0].mxu0
    %v174 = vadd.f32 %v101, %v173
    %v175 = vpop.f32.mrb[0].mxu0
    %176 = vdwg.mxu0
    %v177 = vmax.f32 %v174, 0.0
    %v178 = vld [vmem:[%s3] sm:$0xff]
    %v179 = vld [vmem:[%s3 + $0x8] sm:$0xff]
    %v180 = vld [vmem:[%s3 + $0x10] sm:$0xff]
    %v181 = vld [vmem:[%s3 + $0x18] sm:$0xff]
    %v182 = vld [vmem:[%s3 + $0x20] sm:$0xff]
    %v183 = vld [vmem:[%s3 + $0x28] sm:$0xff]
    %v184 = vld [vmem:[%s3 + $0x30] sm:$0xff]
    %v185 = vld [vmem:[%s3 + $0x38] sm:$0xff]
    %v186 = vld [vmem:[%s3 + $0x40] sm:$0xff]
    %v187 = vld [vmem:[%s3 + $0x48] sm:$0xff]
    %v188 = vld [vmem:[%s3 + $0x50] sm:$0xff]
    %v189 = vld [vmem:[%s3 + $0x58] sm:$0xff]
    %v190 = vld [vmem:[%s3 + $0x60] sm:$0xff]
    %v191 = vld [vmem:[%s3 + $0x68] sm:$0xff]
    %v192 = vld [vmem:[%s3 + $0x70] sm:$0xff]
    %v193 = vld [vmem:[%s3 + $0x78] sm:$0xff]
    %v194 = vld [vmem:[#allocation7] sm:$0x1]
    %v196 = vlaneseq
    %v197 = vshrl.u32 %v196, 7
    %v198 = vsub.s32 0, %v197
    %v199 = vrot.slane %v194, %v198
    %201 = vmatprep.subr.mxu0 0.0
    %202 = vmatpush1.msra.mxu0 %v178
    %203 = vmatprep.subr.mxu0 0.0
    %204 = vmatpush1.msra.mxu0 %v179
    %205 = vmatprep.subr.mxu0 0.0
    %206 = vmatpush1.msra.mxu0 %v180
    %207 = vmatprep.subr.mxu0 0.0
    %208 = vmatpush1.msra.mxu0 %v181
    %209 = vmatprep.subr.mxu0 0.0
    %210 = vmatpush1.msra.mxu0 %v182
    %211 = vmatprep.subr.mxu0 0.0
    %212 = vmatpush1.msra.mxu0 %v183
    %213 = vmatprep.subr.mxu0 0.0
    %214 = vmatpush1.msra.mxu0 %v184
    %215 = vmatprep.subr.mxu0 0.0
    %216 = vmatpush1.msra.mxu0 %v185
    %217 = vmatprep.subr.mxu0 0.0
    %218 = vmatpush1.msra.mxu0 %v186
    %219 = vmatprep.subr.mxu0 0.0
    %220 = vmatpush1.msra.mxu0 %v187
    %221 = vmatprep.subr.mxu0 0.0
    %222 = vmatpush1.msra.mxu0 %v188
    %223 = vmatprep.subr.mxu0 0.0
    %224 = vmatpush1.msra.mxu0 %v189
    %225 = vmatprep.subr.mxu0 0.0
    %226 = vmatpush1.msra.mxu0 %v190
    %227 = vmatprep.subr.mxu0 0.0
    %228 = vmatpush1.msra.mxu0 %v191
    %229 = vmatprep.subr.mxu0 0.0
    %230 = vmatpush1.msra.mxu0 %v192
    %231 = vmatprep.subr.mxu0 0.0
    %232 = vmatpush1.msra.mxu0 %v193
    %233 = vmatprep.subr.mxu0 0.0
    %234 = vmatpush1.msra.mxu0 0.0
    %235 = vmatprep.subr.mxu0 0.0
    %236 = vmatpush1.msra.mxu0 0.0
    %237 = vmatprep.subr.mxu0 0.0
    %238 = vmatpush1.msra.mxu0 0.0
    %239 = vmatprep.subr.mxu0 0.0
    %240 = vmatpush1.msra.mxu0 0.0
    %241 = vmatprep.subr.mxu0 0.0
    %242 = vmatpush1.msra.mxu0 0.0
    %243 = vmatprep.subr.mxu0 0.0
    %244 = vmatpush1.msra.mxu0 0.0
    %245 = vmatprep.subr.mxu0 0.0
    %246 = vmatpush1.msra.mxu0 0.0
    %247 = vmatprep.subr.mxu0 0.0
    %248 = vmatpush1.msra.mxu0 0.0
    %249 = vmatprep.subr.mxu0 0.0
    %250 = vmatpush1.msra.mxu0 0.0
    %251 = vmatprep.subr.mxu0 0.0
    %252 = vmatpush1.msra.mxu0 0.0
    %253 = vmatprep.subr.mxu0 0.0
    %254 = vmatpush1.msra.mxu0 0.0
    %255 = vmatprep.subr.mxu0 0.0
    %256 = vmatpush1.msra.mxu0 0.0
    %257 = vmatprep.subr.mxu0 0.0
    %258 = vmatpush1.msra.mxu0 0.0
    %259 = vmatprep.subr.mxu0 0.0
    %260 = vmatpush1.msra.mxu0 0.0
    %261 = vmatprep.subr.mxu0 0.0
    %262 = vmatpush1.msra.mxu0 0.0
    %263 = vmatprep.subr.mxu0 0.0
    %264 = vmatpush1.msra.mxu0 0.0
    %265 = vmatprep.mubr.f32.mxu0 0.0
    %266 = vmatmul.mubr.f32.gmra.mrb[0].mxu0 %v177
    %v267 = vpop.f32.mrb[0].mxu0
    %v268 = vadd.f32 %v199, %v267
    %v269 = vpop.f32.mrb[0].mxu0
    %270 = vdwg.mxu0
    %v271 = vmax.f32 %v268, 0.0
    %v272 = vld [vmem:[%s5] sm:$0xff]
    %v273 = vld [vmem:[%s5 + $0x8] sm:$0xff]
    %v274 = vld [vmem:[%s5 + $0x10] sm:$0xff]
    %v275 = vld [vmem:[%s5 + $0x18] sm:$0xff]
    %v276 = vld [vmem:[%s5 + $0x20] sm:$0xff]
    %v277 = vld [vmem:[%s5 + $0x28] sm:$0xff]
    %v278 = vld [vmem:[%s5 + $0x30] sm:$0xff]
    %v279 = vld [vmem:[%s5 + $0x38] sm:$0xff]
    %v280 = vld [vmem:[%s5 + $0x40] sm:$0xff]
    %v281 = vld [vmem:[%s5 + $0x48] sm:$0xff]
    %v282 = vld [vmem:[%s5 + $0x50] sm:$0xff]
    %v283 = vld [vmem:[%s5 + $0x58] sm:$0xff]
    %v284 = vld [vmem:[%s5 + $0x60] sm:$0xff]
    %v285 = vld [vmem:[%s5 + $0x68] sm:$0xff]
    %v286 = vld [vmem:[%s5 + $0x70] sm:$0xff]
    %v287 = vld [vmem:[%s5 + $0x78] sm:$0xff]
    %v288 = vld [vmem:[#allocation8] sm:$0x1]
    %v290 = vlaneseq
    %v291 = vshrl.u32 %v290, 7
    %v292 = vsub.s32 0, %v291
    %v293 = vrot.slane %v288, %v292
    %295 = vmatprep.subr.mxu0 0.0
    %296 = vmatpush1.msra.mxu0 %v272
    %297 = vmatprep.subr.mxu0 0.0
    %298 = vmatpush1.msra.mxu0 %v273
    %299 = vmatprep.subr.mxu0 0.0
    %300 = vmatpush1.msra.mxu0 %v274
    %301 = vmatprep.subr.mxu0 0.0
    %302 = vmatpush1.msra.mxu0 %v275
    %303 = vmatprep.subr.mxu0 0.0
    %304 = vmatpush1.msra.mxu0 %v276
    %305 = vmatprep.subr.mxu0 0.0
    %306 = vmatpush1.msra.mxu0 %v277
    %307 = vmatprep.subr.mxu0 0.0
    %308 = vmatpush1.msra.mxu0 %v278
    %309 = vmatprep.subr.mxu0 0.0
    %310 = vmatpush1.msra.mxu0 %v279
    %311 = vmatprep.subr.mxu0 0.0
    %312 = vmatpush1.msra.mxu0 %v280
    %313 = vmatprep.subr.mxu0 0.0
    %314 = vmatpush1.msra.mxu0 %v281
    %315 = vmatprep.subr.mxu0 0.0
    %316 = vmatpush1.msra.mxu0 %v282
    %317 = vmatprep.subr.mxu0 0.0
    %318 = vmatpush1.msra.mxu0 %v283
    %319 = vmatprep.subr.mxu0 0.0
    %320 = vmatpush1.msra.mxu0 %v284
    %321 = vmatprep.subr.mxu0 0.0
    %322 = vmatpush1.msra.mxu0 %v285
    %323 = vmatprep.subr.mxu0 0.0
    %324 = vmatpush1.msra.mxu0 %v286
    %325 = vmatprep.subr.mxu0 0.0
    %326 = vmatpush1.msra.mxu0 %v287
    %327 = vmatprep.subr.mxu0 0.0
    %328 = vmatpush1.msra.mxu0 0.0
    %329 = vmatprep.subr.mxu0 0.0
    %330 = vmatpush1.msra.mxu0 0.0
    %331 = vmatprep.subr.mxu0 0.0
    %332 = vmatpush1.msra.mxu0 0.0
    %333 = vmatprep.subr.mxu0 0.0
    %334 = vmatpush1.msra.mxu0 0.0
    %335 = vmatprep.subr.mxu0 0.0
    %336 = vmatpush1.msra.mxu0 0.0
    %337 = vmatprep.subr.mxu0 0.0
    %338 = vmatpush1.msra.mxu0 0.0
    %339 = vmatprep.subr.mxu0 0.0
    %340 = vmatpush1.msra.mxu0 0.0
    %341 = vmatprep.subr.mxu0 0.0
    %342 = vmatpush1.msra.mxu0 0.0
    %343 = vmatprep.subr.mxu0 0.0
    %344 = vmatpush1.msra.mxu0 0.0
    %345 = vmatprep.subr.mxu0 0.0
    %346 = vmatpush1.msra.mxu0 0.0
    %347 = vmatprep.subr.mxu0 0.0
    %348 = vmatpush1.msra.mxu0 0.0
    %349 = vmatprep.subr.mxu0 0.0
    %350 = vmatpush1.msra.mxu0 0.0
    %351 = vmatprep.subr.mxu0 0.0
    %352 = vmatpush1.msra.mxu0 0.0
    %353 = vmatprep.subr.mxu0 0.0
    %354 = vmatpush1.msra.mxu0 0.0
    %355 = vmatprep.subr.mxu0 0.0
    %356 = vmatpush1.msra.mxu0 0.0
    %357 = vmatprep.subr.mxu0 0.0
    %358 = vmatpush1.msra.mxu0 0.0
    %359 = vmatprep.mubr.f32.mxu0 0.0
    %360 = vmatmul.mubr.f32.gmra.mrb[0].mxu0 %v271
    %v361 = vpop.f32.mrb[0].mxu0
    %v362 = vadd.f32 %v293, %v361
    %v363 = vpop.f32.mrb[0].mxu0
    %364 = vdwg.mxu0
    %v365 = vmax.f32 %v362, 0.0
    %v366 = vld [vmem:[%s7] sm:$0xff]
    %v367 = vld [vmem:[%s7 + $0x8] sm:$0xff]
    %v368 = vld [vmem:[%s7 + $0x10] sm:$0xff]
    %v369 = vld [vmem:[%s7 + $0x18] sm:$0xff]
    %v370 = vld [vmem:[%s7 + $0x20] sm:$0xff]
    %v371 = vld [vmem:[%s7 + $0x28] sm:$0xff]
    %v372 = vld [vmem:[%s7 + $0x30] sm:$0xff]
    %v373 = vld [vmem:[%s7 + $0x38] sm:$0xff]
    %v374 = vld [vmem:[#allocation10] sm:$0x1]
    %v376 = vlaneseq
    %v377 = vshrl.u32 %v376, 7
    %v378 = vsub.s32 0, %v377
    %v379 = vrot.slane %v374, %v378
    %vm381 = vcmask 523264
    %v383 = vsel %vm381, %v365, 0
    %385 = vmatprep.subr.mxu0 0.0
    %386 = vmatpush1.msra.mxu0 %v366
    %387 = vmatprep.subr.mxu0 0.0
    %388 = vmatpush1.msra.mxu0 %v367
    %389 = vmatprep.subr.mxu0 0.0
    %390 = vmatpush1.msra.mxu0 %v368
    %391 = vmatprep.subr.mxu0 0.0
    %392 = vmatpush1.msra.mxu0 %v369
    %393 = vmatprep.subr.mxu0 0.0
    %394 = vmatpush1.msra.mxu0 %v370
    %395 = vmatprep.subr.mxu0 0.0
    %396 = vmatpush1.msra.mxu0 %v371
    %397 = vmatprep.subr.mxu0 0.0
    %398 = vmatpush1.msra.mxu0 %v372
    %399 = vmatprep.subr.mxu0 0.0
    %400 = vmatpush1.msra.mxu0 %v373
    %401 = vmatprep.subr.mxu0 0.0
    %402 = vmatpush1.msra.mxu0 0.0
    %403 = vmatprep.subr.mxu0 0.0
    %404 = vmatpush1.msra.mxu0 0.0
    %405 = vmatprep.subr.mxu0 0.0
    %406 = vmatpush1.msra.mxu0 0.0
    %407 = vmatprep.subr.mxu0 0.0
    %408 = vmatpush1.msra.mxu0 0.0
    %409 = vmatprep.subr.mxu0 0.0
    %410 = vmatpush1.msra.mxu0 0.0
    %411 = vmatprep.subr.mxu0 0.0
    %412 = vmatpush1.msra.mxu0 0.0
    %413 = vmatprep.subr.mxu0 0.0
    %414 = vmatpush1.msra.mxu0 0.0
    %415 = vmatprep.subr.mxu0 0.0
    %416 = vmatpush1.msra.mxu0 0.0
    %417 = vmatprep.subr.mxu0 0.0
    %418 = vmatpush1.msra.mxu0 0.0
    %419 = vmatprep.subr.mxu0 0.0
    %420 = vmatpush1.msra.mxu0 0.0
    %421 = vmatprep.subr.mxu0 0.0
    %422 = vmatpush1.msra.mxu0 0.0
    %423 = vmatprep.subr.mxu0 0.0
    %424 = vmatpush1.msra.mxu0 0.0
    %425 = vmatprep.subr.mxu0 0.0
    %426 = vmatpush1.msra.mxu0 0.0
    %427 = vmatprep.subr.mxu0 0.0
    %428 = vmatpush1.msra.mxu0 0.0
    %429 = vmatprep.subr.mxu0 0.0
    %430 = vmatpush1.msra.mxu0 0.0
    %431 = vmatprep.subr.mxu0 0.0
    %432 = vmatpush1.msra.mxu0 0.0
    %433 = vmatprep.subr.mxu0 0.0
    %434 = vmatpush1.msra.mxu0 0.0
    %435 = vmatprep.subr.mxu0 0.0
    %436 = vmatpush1.msra.mxu0 0.0
    %437 = vmatprep.subr.mxu0 0.0
    %438 = vmatpush1.msra.mxu0 0.0
    %439 = vmatprep.subr.mxu0 0.0
    %440 = vmatpush1.msra.mxu0 0.0
    %441 = vmatprep.subr.mxu0 0.0
    %442 = vmatpush1.msra.mxu0 0.0
    %443 = vmatprep.subr.mxu0 0.0
    %444 = vmatpush1.msra.mxu0 0.0
    %445 = vmatprep.subr.mxu0 0.0
    %446 = vmatpush1.msra.mxu0 0.0
    %447 = vmatprep.subr.mxu0 0.0
    %448 = vmatpush1.msra.mxu0 0.0
    %449 = vmatprep.mubr.f32.mxu0 0.0
    %450 = vmatmul.mubr.f32.gmra.mrb[0].mxu0 %v383
    %v451 = vpop.f32.mrb[0].mxu0
    %v452 = vadd.f32 %v379, %v451
    %v453 = vpop.f32.mrb[0].mxu0
    %454 = vdwg.mxu0
    %455 = vst [vmem:[#allocation11] sm:$0xff] %v452
    // Predicated region
    $region58: #{net_forward.1} parent=1 // pred_check
      _
    $region59: #{net_forward.1} parent=1 // pred_check_branch
      %457 = sbr.rel (0) target = $region61
    $region60: #{net_forward.1} parent=1 // pred_region
      %s459 = ssub.s32 128, 128
      %460 = vsyncadd [#allocation4], %s459
      %s462 = sshll.u32 [#allocation11], 4
      %s463 = int_to_ptr.vmem [resolvable:$true] %s462
      %465 = dma.vmem_to_hbm [thread:$0]  %s463, 128, %s9, [#allocation4]
    $region61: #{net_forward.1} parent=1 // pred_fallthru
      _
    // Predicated region
    $region62: #{net_forward.1} parent=1 // pred_check
      _
    $region63: #{net_forward.1} parent=1 // pred_check_branch
      %467 = sbr.rel (0) target = $region65
    $region64: #{net_forward.1} parent=1 // pred_region
      %468 = dma.done [#allocation4], 128
    $region65: #{net_forward.1} parent=1 // pred_fallthru
      _
    %469 = vsyncpa [#allocation3], 1
    %470 = vsyncpa [#allocation6], 1
    %471 = vsyncpa [#allocation9], 1
    %472 = vsyncpa [#allocation4], 1

</llo_original>
